<compile_context>
chip_gen: v7x
topology: tpu7x:2x2x1
jax: 0.10.0
libtpu: 0.0.40
codegen_flags: <defaults>
</compile_context>

<pallas_src>
import jax
import jax.numpy as jnp
from jax.experimental import pallas as pl
from jax.experimental.pallas import tpu as pltpu

_IN = 10        # input features
_HIDDEN = 50    # hidden width
_K_AUG = 16     # sublane-aligned contraction dim: [x (10) | ones (1) | zeros (5)]
_H_PAD = 56     # hidden rows padded to a multiple of 8; row 50 is the b2 carrier
_W2_ROWS = 8    # sublane-aligned row count for the layer-2 weight row


def pack_params(w1, b1, w2, b2):
    """Pack torch-native nn.Linear params for the kernel.

    Expects torch layouts:
      w1 = fc[0].weight  [50, 10]  (out, in)      b1 = fc[0].bias  [50]
      w2 = fc[2].weight  [1, 50]   (out, in)      b2 = fc[2].bias  [1]

    Returns (w1p, w2p):
      w1p [56, 16]: rows 0..49, lanes 0..9 = w1; lane 10 = b1; row 50, lane 10 = 1.0
                    (carrier so H^T[50, :] == 1.0 for every batch lane, surviving ReLU).
      w2p [8, 56] : row 0, lanes 0..49 = w2; lane 50 = b2 (added via the carrier row).
    """
    w1 = jnp.asarray(w1, jnp.float32).reshape(_HIDDEN, _IN)
    b1 = jnp.asarray(b1, jnp.float32).reshape(_HIDDEN)
    w2 = jnp.asarray(w2, jnp.float32).reshape(_HIDDEN)
    b2 = jnp.asarray(b2, jnp.float32).reshape(())
    w1p = jnp.zeros((_H_PAD, _K_AUG), jnp.float32)
    w1p = w1p.at[:_HIDDEN, :_IN].set(w1)
    w1p = w1p.at[:_HIDDEN, _IN].set(b1)
    w1p = w1p.at[_HIDDEN, _IN].set(1.0)
    w2p = jnp.zeros((_W2_ROWS, _H_PAD), jnp.float32)
    w2p = w2p.at[0, :_HIDDEN].set(w2)
    w2p = w2p.at[0, _HIDDEN].set(b2)
    return w1p, w2p


def _mlp_kernel(xt_ref, w1_ref, w2_ref, o_ref):
    # xt_ref: [16, tb]  batch-on-lanes input; row 10 is all-ones (b1/b2 carrier)
    # w1_ref: [56, 16]  [W1 | b1] + carrier row   (pinned VMEM-resident across tiles)
    # w2_ref: [8, 56]   row 0 = [w2 | b2 | 0...]  (pinned)
    # o_ref : [1, tb]   lane-dense output tile
    ht = jnp.dot(w1_ref[...], xt_ref[...],
                 preferred_element_type=jnp.float32)      # [56, tb] = H^T (+ carrier row)
    ht = jnp.maximum(ht, 0.0)                             # ReLU; carrier row stays 1.0
    y = jnp.dot(w2_ref[...], ht,
                preferred_element_type=jnp.float32)       # [8, tb]; row 0 is the answer
    o_ref[...] = y[0:1, :].astype(o_ref.dtype)


def bandwidth_predictor(x, params, *, block_batch=8192, min_pallas_batch=512):
    """x: [B, 10] float -> [B, 1] float (torch BandwidthPredictor.forward semantics)."""
    w1p, w2p = params
    x = jnp.asarray(x, jnp.float32)
    B = x.shape[0]

    if B < min_pallas_batch:
        # Small-batch fast path: the Pallas call would be pure launch/wrapper overhead.
        h = jnp.maximum(x @ w1p[:_HIDDEN, :_IN].T + w1p[:_HIDDEN, _IN], 0.0)
        y = h @ w2p[0, :_HIDDEN] + w2p[0, _HIDDEN]
        return y.reshape(B, 1)

    # Balanced batch tiling: ragged remainder is < 128 rows per tile (no whole-array
    # pad), and large batches get >= 2 tiles so both v7x TensorCores are fed.
    num_tiles = pl.cdiv(B, block_batch)
    if num_tiles == 1 and B >= 2048:
        num_tiles = 2
    if num_tiles == 1:
        tb = B                                           # full-array block
    else:
        tb = ((pl.cdiv(B, num_tiles) + 127) // 128) * 128
    bp = num_tiles * tb

    # Build the batch-on-lanes input in one fused pass:
    #   rows 0..9 = x^T, row 10 = 1.0 (bias carrier), rows 11..15 = 0, columns >= B = 0.
    # Padded columns produce relu(b1)@w2 + b2 garbage that is sliced off below.
    xt = jnp.zeros((_K_AUG, bp), jnp.float32)
    xt = xt.at[_IN, :].set(1.0)
    xt = xt.at[:_IN, :B].set(x.T)

    out = pl.pallas_call(
        _mlp_kernel,
        out_shape=jax.ShapeDtypeStruct((1, bp), jnp.float32),
        grid_spec=pltpu.PrefetchScalarGridSpec(
            num_scalar_prefetch=0,
            grid=(num_tiles,),
            in_specs=[
                pl.BlockSpec((_K_AUG, tb), lambda i: (0, i)),        # batch-tiled x^T
                pl.BlockSpec((_H_PAD, _K_AUG), lambda i: (0, 0)),    # pinned layer-1 params
                pl.BlockSpec((_W2_ROWS, _H_PAD), lambda i: (0, 0)),  # pinned layer-2 params
            ],
            out_specs=pl.BlockSpec((1, tb), lambda i: (0, i)),       # lane-dense output
        ),
        compiler_params=pltpu.CompilerParams(
            dimension_semantics=("parallel",),   # shard batch tiles across v7x cores
        ),
    )(xt, w1p, w2p)

    return out[0, :B].reshape(B, 1)


def init_params(key):
    """Synthetic params in torch nn.Linear layout (weight [out, in], bias [out])."""
    k1, k2, k3, k4 = jax.random.split(key, 4)
    lim1 = 1.0 / jnp.sqrt(10.0)
    lim2 = 1.0 / jnp.sqrt(50.0)
    w1 = jax.random.uniform(k1, (_HIDDEN, _IN), jnp.float32, -lim1, lim1)
    b1 = jax.random.uniform(k2, (_HIDDEN,), jnp.float32, -lim1, lim1)
    w2 = jax.random.uniform(k3, (1, _HIDDEN), jnp.float32, -lim2, lim2)
    b2 = jax.random.uniform(k4, (1,), jnp.float32, -lim2, lim2)
    return w1, b1, w2, b2


def _reference(x, w1, b1, w2, b2):
    h = jnp.maximum(x @ w1.T + b1, 0.0)
    return h @ w2.T + b2


if __name__ == "__main__":
    key = jax.random.PRNGKey(0)
    kp, kx1, kx2 = jax.random.split(key, 3)
    w1, b1, w2, b2 = init_params(kp)
    params = pack_params(w1, b1, w2, b2)

    # 1) Small batch -> XLA fast path (semantics check, no Pallas launch).
    x_small = jax.random.normal(kx1, (8, _IN), jnp.float32)
    out_small = jax.block_until_ready(bandwidth_predictor(x_small, params))
    assert out_small.shape == (8, 1)
    assert jnp.allclose(out_small, _reference(x_small, w1, b1, w2, b2),
                        atol=1e-5, rtol=1e-5)

    # 2) Default dispatch at a modest batch -> single-tile Pallas kernel.
    x_big = jax.random.normal(kx2, (1000, _IN), jnp.float32)
    ref_big = _reference(x_big, w1, b1, w2, b2)
    out_big = jax.block_until_ready(bandwidth_predictor(x_big, params))
    assert out_big.shape == (1000, 1)
    # Loose-ish tolerance: the MXU's default f32 pass structure can differ slightly
    # from the XLA reference dot; real layout/bias bugs would be O(0.1) errors.
    assert jnp.allclose(out_big, ref_big, atol=2e-2, rtol=2e-2)

    # 3) Forced multi-tile Pallas path (3 tiles, ragged batch, pinned params).
    out_tiled = jax.block_until_ready(
        bandwidth_predictor(x_big, params, block_batch=384, min_pallas_batch=0))
    assert out_tiled.shape == (1000, 1)
    assert jnp.allclose(out_tiled, ref_big, atol=2e-2, rtol=2e-2)

    print("KERNEL_OK")
</pallas_src>

<mosaic_0001>
module attributes {stable_mosaic.version = 11 : i64} {
  func.func @_mlp_kernel(%arg0: i32, %arg1: memref<16x1000xf32, #tpu.memory_space<vmem>>, %arg2: memref<56x16xf32, #tpu.memory_space<vmem>>, %arg3: memref<8x56xf32, #tpu.memory_space<vmem>>, %arg4: memref<1x1000xf32, #tpu.memory_space<vmem>>) attributes {dimension_semantics = [#tpu.dimension_semantics<parallel>], iteration_bounds = array<i64: 1>, scalar_prefetch = 0 : i64, scratch_operands = 0 : i64, tpu.core_type = #tpu.core_type<tc>, window_params = [{transform_indices = @transform_0, window_bounds = array<i64: 16, 1000>}, {pipeline_mode = #tpu.pipeline_mode<synchronous>, transform_indices = @transform_1, window_bounds = array<i64: 56, 16>}, {pipeline_mode = #tpu.pipeline_mode<synchronous>, transform_indices = @transform_2, window_bounds = array<i64: 8, 56>}, {transform_indices = @transform_3, window_bounds = array<i64: 1, 1000>}]} {
    %c0 = arith.constant 0 : index
    %c0_0 = arith.constant 0 : index
    %0 = vector.load %arg2[%c0, %c0_0] : memref<56x16xf32, #tpu.memory_space<vmem>>, vector<56x16xf32>
    %c0_1 = arith.constant 0 : index
    %c0_2 = arith.constant 0 : index
    %1 = vector.load %arg1[%c0_1, %c0_2] : memref<16x1000xf32, #tpu.memory_space<vmem>>, vector<16x1000xf32>
    %cst = arith.constant dense<0.000000e+00> : vector<56x1000xf32>
    %2 = tpu.matmul %0, %1, %cst {dimension_numbers = #tpu.dot_dimension_numbers<[1], [0], [0], [1], [0, 0, 1, 1], [], []>} : vector<56x16xf32>, vector<16x1000xf32>, vector<56x1000xf32> -> vector<56x1000xf32>
    %cst_3 = arith.constant 0.000000e+00 : f32
    %3 = vector.broadcast %cst_3 : f32 to vector<56x1000xf32>
    %4 = arith.maximumf %2, %3 : vector<56x1000xf32>
    %c0_4 = arith.constant 0 : index
    %c0_5 = arith.constant 0 : index
    %5 = vector.load %arg3[%c0_4, %c0_5] : memref<8x56xf32, #tpu.memory_space<vmem>>, vector<8x56xf32>
    %cst_6 = arith.constant dense<0.000000e+00> : vector<8x1000xf32>
    %6 = tpu.matmul %5, %4, %cst_6 {dimension_numbers = #tpu.dot_dimension_numbers<[1], [0], [0], [1], [0, 0, 1, 1], [], []>} : vector<8x56xf32>, vector<56x1000xf32>, vector<8x1000xf32> -> vector<8x1000xf32>
    %7 = vector.extract_strided_slice %6 {offsets = [0, 0], sizes = [1, 1000], strides = [1, 1]} : vector<8x1000xf32> to vector<1x1000xf32>
    %c0_7 = arith.constant 0 : index
    %c0_8 = arith.constant 0 : index
    %8 = vector.load %arg4[%c0_7, %c0_8] : memref<1x1000xf32, #tpu.memory_space<vmem>>, vector<1x1000xf32>
    tpu.vector_store %arg4[%c0_7, %c0_8], %7 {strides = array<i32>} : memref<1x1000xf32, #tpu.memory_space<vmem>>, vector<1x1000xf32>,
    return
  }
  func.func @transform_0(%arg0: i32) -> (i32, i32) {
    %c0_i32 = arith.constant 0 : i32
    %c0_i32_0 = arith.constant 0 : i32
    return %c0_i32, %arg0 : i32, i32
  }
  func.func @transform_1(%arg0: i32) -> (i32, i32) {
    %c0_i32 = arith.constant 0 : i32
    %c0_i32_0 = arith.constant 0 : i32
    %c0_i32_1 = arith.constant 0 : i32
    return %c0_i32, %c0_i32_0 : i32, i32
  }
  func.func @transform_2(%arg0: i32) -> (i32, i32) {
    %c0_i32 = arith.constant 0 : i32
    %c0_i32_0 = arith.constant 0 : i32
    %c0_i32_1 = arith.constant 0 : i32
    return %c0_i32, %c0_i32_0 : i32, i32
  }
  func.func @transform_3(%arg0: i32) -> (i32, i32) {
    %c0_i32 = arith.constant 0 : i32
    %c0_i32_0 = arith.constant 0 : i32
    return %c0_i32, %arg0 : i32, i32
  }
}

</mosaic_0001>

<llo_original>
// kernel: tpu_custom_call.1
$region0: #{tpu_custom_call.1}
  #allocation0 [shape = 'u32[]', space=smem, size = 0x4, offset = 0x4, fixed_abs, tag = 'smem constant byte address 0x4 - core index']
  #allocation1 [shape = 'u32[144,128]{1,0:T(1,128)}', space=vmem, size = 0x12000, scoped, tag = 'internal scratch']
  %s0 = inlined_call_operand.hbm [shape: f32[16,1000], index: 0, kind: input, shape index: {}]
  %s1 = inlined_call_operand.vmem [shape: f32[56,16], index: 1, kind: input, shape index: {}]
  %s2 = inlined_call_operand.vmem [shape: f32[8,56], index: 2, kind: input, shape index: {}]
  %s3 = inlined_call_operand.hbm [shape: f32[1,1000], index: 3, kind: output, shape index: {}]
  %s4 = sld [smem:[#allocation0]]
  $region26: #{tpu_custom_call.1} parent=0
    _
  %s6 = ssub.s32 1, %s4
  %s7 = scalar_select 0, %s6, %s4
  $region1: #{tpu_custom_call.1} parent=0
    #allocation2 [shape = 'u8[65536]{0}', space=vmem, size = 0x10000, scoped, tag = 'input window, operand 0, single buffered']
    #allocation3 [shape = 's32[1]{0}', space=sflag, size = 0x4, scoped, tag = 'scoped memory for tpu_custom_call.1']
    #allocation4 [shape = 's32[1]{0}', space=sflag, size = 0x4, scoped, tag = 'scoped memory for tpu_custom_call.1']
    #allocation5 [shape = 'u8[4096]{0}', space=vmem, size = 0x1000, scoped, tag = 'output window, operand 0, single buffered']
    %8 = vsyncpa [#allocation3], 0
    %9 = vsyncpa [#allocation4], 0
    // Predicated region
    $region2: #{tpu_custom_call.1} parent=1 // pred_check
      _
    $region3: #{tpu_custom_call.1} parent=1 // pred_check_branch
      %11 = sbr.rel (0) target = $region5
    $region4: #{tpu_custom_call.1} parent=1 // pred_region
      %s13 = ssub.s32 2048, 2048
      %14 = vsyncadd [#allocation3], %s13
      %s15 = sshll.u32 [#allocation2], 4
      %s16 = int_to_ptr.vmem [resolvable:$true] %s15
      %21 = dma.hbm_to_vmem [thread:$0]  %s0, 2048, %s16, [#allocation3], 1024, 1024, 64
    $region5: #{tpu_custom_call.1} parent=1 // pred_fallthru
      _
    // Predicated region
    $region6: #{tpu_custom_call.1} parent=1 // pred_check
      _
    $region7: #{tpu_custom_call.1} parent=1 // pred_check_branch
      %23 = sbr.rel (0) target = $region9
    $region8: #{tpu_custom_call.1} parent=1 // pred_region
      _
    $region9: #{tpu_custom_call.1} parent=1 // pred_fallthru
      _
    // Predicated region
    $region10: #{tpu_custom_call.1} parent=1 // pred_check
      _
    $region11: #{tpu_custom_call.1} parent=1 // pred_check_branch
      %25 = sbr.rel (0) target = $region13
    $region12: #{tpu_custom_call.1} parent=1 // pred_region
      _
    $region13: #{tpu_custom_call.1} parent=1 // pred_fallthru
      _
    // Predicated region
    $region14: #{tpu_custom_call.1} parent=1 // pred_check
      _
    $region15: #{tpu_custom_call.1} parent=1 // pred_check_branch
      %27 = sbr.rel (0) target = $region17
    $region16: #{tpu_custom_call.1} parent=1 // pred_region
      %28 = dma.done [#allocation3], 2048
    $region17: #{tpu_custom_call.1} parent=1 // pred_fallthru
      _
    %v29 = vld [vmem:[%s1] sm:$0xff]
    %v30 = vld [vmem:[%s1 + $0x8] sm:$0xff]
    %v31 = vld [vmem:[%s1 + $0x10] sm:$0xff]
    %v32 = vld [vmem:[%s1 + $0x18] sm:$0xff]
    %v33 = vld [vmem:[%s1 + $0x20] sm:$0xff]
    %v34 = vld [vmem:[%s1 + $0x28] sm:$0xff]
    %v35 = vld [vmem:[%s1 + $0x30] sm:$0xff]
    %v36 = vld [vmem:[#allocation2] sm:$0xff]
    %v37 = vld [vmem:[#allocation2 + $0x8] sm:$0xff]
    %v38 = vld [vmem:[#allocation2 + $0x10] sm:$0xff]
    %v39 = vld [vmem:[#allocation2 + $0x18] sm:$0xff]
    %v40 = vld [vmem:[#allocation2 + $0x20] sm:$0xff]
    %v41 = vld [vmem:[#allocation2 + $0x28] sm:$0xff]
    %v42 = vld [vmem:[#allocation2 + $0x30] sm:$0xff]
    %v43 = vld [vmem:[#allocation2 + $0x38] sm:$0xff]
    %v44 = vld [vmem:[#allocation2 + $0x40] sm:$0xff]
    %v45 = vld [vmem:[#allocation2 + $0x48] sm:$0xff]
    %v46 = vld [vmem:[#allocation2 + $0x50] sm:$0xff]
    %v47 = vld [vmem:[#allocation2 + $0x58] sm:$0xff]
    %v48 = vld [vmem:[#allocation2 + $0x60] sm:$0xff]
    %v49 = vld [vmem:[#allocation2 + $0x68] sm:$0xff]
    %v50 = vld [vmem:[#allocation2 + $0x70] sm:$0xff]
    %v51 = vld [vmem:[#allocation2 + $0x78] sm:$0xff]
    %vm52 = vcmask 130048
    %v54 = vsel %vm52, %v29, 0
    %v57 = vsel %vm52, %v30, 0
    %v60 = vsel %vm52, %v31, 0
    %v63 = vsel %vm52, %v32, 0
    %v66 = vsel %vm52, %v33, 0
    %v69 = vsel %vm52, %v34, 0
    %v72 = vsel %vm52, %v35, 0
    %74 = vmatprep.subr.mxu0 %v37
    %75 = vmatpush1.msra.mxu0 %v36
    %76 = vmatprep.subr.mxu0 %v45
    %77 = vmatpush1.msra.mxu0 %v44
    %78 = vmatprep.subr.mxu0 0.0
    %79 = vmatpush1.msra.mxu0 0.0
    %80 = vmatprep.subr.mxu0 0.0
    %81 = vmatpush1.msra.mxu0 0.0
    %82 = vmatprep.subr.mxu0 0.0
    %83 = vmatpush1.msra.mxu0 0.0
    %84 = vmatprep.subr.mxu0 0.0
    %85 = vmatpush1.msra.mxu0 0.0
    %86 = vmatprep.subr.mxu0 0.0
    %87 = vmatpush1.msra.mxu0 0.0
    %88 = vmatprep.subr.mxu0 0.0
    %89 = vmatpush1.msra.mxu0 0.0
    %90 = vmatprep.subr.mxu0 0.0
    %91 = vmatpush1.msra.mxu0 0.0
    %92 = vmatprep.subr.mxu0 0.0
    %93 = vmatpush1.msra.mxu0 0.0
    %94 = vmatprep.subr.mxu0 0.0
    %95 = vmatpush1.msra.mxu0 0.0
    %96 = vmatprep.subr.mxu0 0.0
    %97 = vmatpush1.msra.mxu0 0.0
    %98 = vmatprep.subr.mxu0 0.0
    %99 = vmatpush1.msra.mxu0 0.0
    %100 = vmatprep.subr.mxu0 0.0
    %101 = vmatpush1.msra.mxu0 0.0
    %102 = vmatprep.subr.mxu0 0.0
    %103 = vmatpush1.msra.mxu0 0.0
    %104 = vmatprep.subr.mxu0 0.0
    %105 = vmatpush1.msra.mxu0 0.0
    %106 = vmatprep.subr.mxu0 0.0
    %107 = vmatpush1.msra.mxu0 0.0
    %108 = vmatprep.subr.mxu0 0.0
    %109 = vmatpush1.msra.mxu0 0.0
    %110 = vmatprep.subr.mxu0 0.0
    %111 = vmatpush1.msra.mxu0 0.0
    %112 = vmatprep.subr.mxu0 0.0
    %113 = vmatpush1.msra.mxu0 0.0
    %114 = vmatprep.subr.mxu0 0.0
    %115 = vmatpush1.msra.mxu0 0.0
    %116 = vmatprep.subr.mxu0 0.0
    %117 = vmatpush1.msra.mxu0 0.0
    %118 = vmatprep.subr.mxu0 0.0
    %119 = vmatpush1.msra.mxu0 0.0
    %120 = vmatprep.subr.mxu0 0.0
    %121 = vmatpush1.msra.mxu0 0.0
    %122 = vmatprep.subr.mxu0 0.0
    %123 = vmatpush1.msra.mxu0 0.0
    %124 = vmatprep.subr.mxu0 0.0
    %125 = vmatpush1.msra.mxu0 0.0
    %126 = vmatprep.subr.mxu0 0.0
    %127 = vmatpush1.msra.mxu0 0.0
    %128 = vmatprep.subr.mxu0 0.0
    %129 = vmatpush1.msra.mxu0 0.0
    %130 = vmatprep.subr.mxu0 0.0
    %131 = vmatpush1.msra.mxu0 0.0
    %132 = vmatprep.subr.mxu0 0.0
    %133 = vmatpush1.msra.mxu0 0.0
    %134 = vmatprep.subr.mxu0 0.0
    %135 = vmatpush1.msra.mxu0 0.0
    %136 = vmatprep.subr.mxu0 0.0
    %137 = vmatpush1.msra.mxu0 0.0
    %138 = vmatprep.mubr.f32.mxu0 0.0
    %139 = vmatmul.mubr.f32.gmra.mrb[0].mxu0 %v54
    %v140 = vpop.f32.mrb[0].mxu0
    %v141 = vadd.f32 0.0, %v140
    %v142 = vpop.f32.mrb[0].mxu0
    %v143 = vadd.f32 0.0, %v142
    %144 = vmatprep.mubr.f32.mxu0 0.0
    %145 = vmatmul.mubr.f32.gmra.mrb[0].mxu0 %v57
    %v146 = vpop.f32.mrb[0].mxu0
    %v147 = vadd.f32 0.0, %v146
    %v148 = vpop.f32.mrb[0].mxu0
    %v149 = vadd.f32 0.0, %v148
    %150 = vmatprep.mubr.f32.mxu0 0.0
    %151 = vmatmul.mubr.f32.gmra.mrb[0].mxu0 %v60
    %v152 = vpop.f32.mrb[0].mxu0
    %v153 = vadd.f32 0.0, %v152
    %v154 = vpop.f32.mrb[0].mxu0
    %v155 = vadd.f32 0.0, %v154
    %156 = vmatprep.mubr.f32.mxu0 0.0
    %157 = vmatmul.mubr.f32.gmra.mrb[0].mxu0 %v63
    %v158 = vpop.f32.mrb[0].mxu0
    %v159 = vadd.f32 0.0, %v158
    %v160 = vpop.f32.mrb[0].mxu0
    %v161 = vadd.f32 0.0, %v160
    %162 = vmatprep.mubr.f32.mxu0 0.0
    %163 = vmatmul.mubr.f32.gmra.mrb[0].mxu0 %v66
    %v164 = vpop.f32.mrb[0].mxu0
    %v165 = vadd.f32 0.0, %v164
    %v166 = vpop.f32.mrb[0].mxu0
    %v167 = vadd.f32 0.0, %v166
    %168 = vmatprep.mubr.f32.mxu0 0.0
    %169 = vmatmul.mubr.f32.gmra.mrb[0].mxu0 %v69
    %v170 = vpop.f32.mrb[0].mxu0
    %v171 = vadd.f32 0.0, %v170
    %v172 = vpop.f32.mrb[0].mxu0
    %v173 = vadd.f32 0.0, %v172
    %174 = vmatprep.mubr.f32.mxu0 0.0
    %175 = vmatmul.mubr.f32.gmra.mrb[0].mxu0 %v72
    %v176 = vpop.f32.mrb[0].mxu0
    %v177 = vadd.f32 0.0, %v176
    %v178 = vpop.f32.mrb[0].mxu0
    %v179 = vadd.f32 0.0, %v178
    %180 = vdwg.mxu0
    %181 = vmatprep.subr.mxu0 %v39
    %182 = vmatpush1.msra.mxu0 %v38
    %183 = vmatprep.subr.mxu0 %v47
    %184 = vmatpush1.msra.mxu0 %v46
    %185 = vmatprep.subr.mxu0 0.0
    %186 = vmatpush1.msra.mxu0 0.0
    %187 = vmatprep.subr.mxu0 0.0
    %188 = vmatpush1.msra.mxu0 0.0
    %189 = vmatprep.subr.mxu0 0.0
    %190 = vmatpush1.msra.mxu0 0.0
    %191 = vmatprep.subr.mxu0 0.0
    %192 = vmatpush1.msra.mxu0 0.0
    %193 = vmatprep.subr.mxu0 0.0
    %194 = vmatpush1.msra.mxu0 0.0
    %195 = vmatprep.subr.mxu0 0.0
    %196 = vmatpush1.msra.mxu0 0.0
    %197 = vmatprep.subr.mxu0 0.0
    %198 = vmatpush1.msra.mxu0 0.0
    %199 = vmatprep.subr.mxu0 0.0
    %200 = vmatpush1.msra.mxu0 0.0
    %201 = vmatprep.subr.mxu0 0.0
    %202 = vmatpush1.msra.mxu0 0.0
    %203 = vmatprep.subr.mxu0 0.0
    %204 = vmatpush1.msra.mxu0 0.0
    %205 = vmatprep.subr.mxu0 0.0
    %206 = vmatpush1.msra.mxu0 0.0
    %207 = vmatprep.subr.mxu0 0.0
    %208 = vmatpush1.msra.mxu0 0.0
    %209 = vmatprep.subr.mxu0 0.0
    %210 = vmatpush1.msra.mxu0 0.0
    %211 = vmatprep.subr.mxu0 0.0
    %212 = vmatpush1.msra.mxu0 0.0
    %213 = vmatprep.subr.mxu0 0.0
    %214 = vmatpush1.msra.mxu0 0.0
    %215 = vmatprep.subr.mxu0 0.0
    %216 = vmatpush1.msra.mxu0 0.0
    %217 = vmatprep.subr.mxu0 0.0
    %218 = vmatpush1.msra.mxu0 0.0
    %219 = vmatprep.subr.mxu0 0.0
    %220 = vmatpush1.msra.mxu0 0.0
    %221 = vmatprep.subr.mxu0 0.0
    %222 = vmatpush1.msra.mxu0 0.0
    %223 = vmatprep.subr.mxu0 0.0
    %224 = vmatpush1.msra.mxu0 0.0
    %225 = vmatprep.subr.mxu0 0.0
    %226 = vmatpush1.msra.mxu0 0.0
    %227 = vmatprep.subr.mxu0 0.0
    %228 = vmatpush1.msra.mxu0 0.0
    %229 = vmatprep.subr.mxu0 0.0
    %230 = vmatpush1.msra.mxu0 0.0
    %231 = vmatprep.subr.mxu0 0.0
    %232 = vmatpush1.msra.mxu0 0.0
    %233 = vmatprep.subr.mxu0 0.0
    %234 = vmatpush1.msra.mxu0 0.0
    %235 = vmatprep.subr.mxu0 0.0
    %236 = vmatpush1.msra.mxu0 0.0
    %237 = vmatprep.subr.mxu0 0.0
    %238 = vmatpush1.msra.mxu0 0.0
    %239 = vmatprep.subr.mxu0 0.0
    %240 = vmatpush1.msra.mxu0 0.0
    %241 = vmatprep.subr.mxu0 0.0
    %242 = vmatpush1.msra.mxu0 0.0
    %243 = vmatprep.subr.mxu0 0.0
    %244 = vmatpush1.msra.mxu0 0.0
    %245 = vmatprep.mubr.f32.mxu0 0.0
    %246 = vmatmul.mubr.f32.gmra.mrb[0].mxu0 %v54
    %v247 = vpop.f32.mrb[0].mxu0
    %v248 = vadd.f32 0.0, %v247
    %v249 = vpop.f32.mrb[0].mxu0
    %v250 = vadd.f32 0.0, %v249
    %251 = vmatprep.mubr.f32.mxu0 0.0
    %252 = vmatmul.mubr.f32.gmra.mrb[0].mxu0 %v57
    %v253 = vpop.f32.mrb[0].mxu0
    %v254 = vadd.f32 0.0, %v253
    %v255 = vpop.f32.mrb[0].mxu0
    %v256 = vadd.f32 0.0, %v255
    %257 = vmatprep.mubr.f32.mxu0 0.0
    %258 = vmatmul.mubr.f32.gmra.mrb[0].mxu0 %v60
    %v259 = vpop.f32.mrb[0].mxu0
    %v260 = vadd.f32 0.0, %v259
    %v261 = vpop.f32.mrb[0].mxu0
    %v262 = vadd.f32 0.0, %v261
    %263 = vmatprep.mubr.f32.mxu0 0.0
    %264 = vmatmul.mubr.f32.gmra.mrb[0].mxu0 %v63
    %v265 = vpop.f32.mrb[0].mxu0
    %v266 = vadd.f32 0.0, %v265
    %v267 = vpop.f32.mrb[0].mxu0
    %v268 = vadd.f32 0.0, %v267
    %269 = vmatprep.mubr.f32.mxu0 0.0
    %270 = vmatmul.mubr.f32.gmra.mrb[0].mxu0 %v66
    %v271 = vpop.f32.mrb[0].mxu0
    %v272 = vadd.f32 0.0, %v271
    %v273 = vpop.f32.mrb[0].mxu0
    %v274 = vadd.f32 0.0, %v273
    %275 = vmatprep.mubr.f32.mxu0 0.0
    %276 = vmatmul.mubr.f32.gmra.mrb[0].mxu0 %v69
    %v277 = vpop.f32.mrb[0].mxu0
    %v278 = vadd.f32 0.0, %v277
    %v279 = vpop.f32.mrb[0].mxu0
    %v280 = vadd.f32 0.0, %v279
    %281 = vmatprep.mubr.f32.mxu0 0.0
    %282 = vmatmul.mubr.f32.gmra.mrb[0].mxu0 %v72
    %v283 = vpop.f32.mrb[0].mxu0
    %v284 = vadd.f32 0.0, %v283
    %v285 = vpop.f32.mrb[0].mxu0
    %v286 = vadd.f32 0.0, %v285
    %287 = vdwg.mxu0
    %288 = vmatprep.subr.mxu0 %v41
    %289 = vmatpush1.msra.mxu0 %v40
    %290 = vmatprep.subr.mxu0 %v49
    %291 = vmatpush1.msra.mxu0 %v48
    %292 = vmatprep.subr.mxu0 0.0
    %293 = vmatpush1.msra.mxu0 0.0
    %294 = vmatprep.subr.mxu0 0.0
    %295 = vmatpush1.msra.mxu0 0.0
    %296 = vmatprep.subr.mxu0 0.0
    %297 = vmatpush1.msra.mxu0 0.0
    %298 = vmatprep.subr.mxu0 0.0
    %299 = vmatpush1.msra.mxu0 0.0
    %300 = vmatprep.subr.mxu0 0.0
    %301 = vmatpush1.msra.mxu0 0.0
    %302 = vmatprep.subr.mxu0 0.0
    %303 = vmatpush1.msra.mxu0 0.0
    %304 = vmatprep.subr.mxu0 0.0
    %305 = vmatpush1.msra.mxu0 0.0
    %306 = vmatprep.subr.mxu0 0.0
    %307 = vmatpush1.msra.mxu0 0.0
    %308 = vmatprep.subr.mxu0 0.0
    %309 = vmatpush1.msra.mxu0 0.0
    %310 = vmatprep.subr.mxu0 0.0
    %311 = vmatpush1.msra.mxu0 0.0
    %312 = vmatprep.subr.mxu0 0.0
    %313 = vmatpush1.msra.mxu0 0.0
    %314 = vmatprep.subr.mxu0 0.0
    %315 = vmatpush1.msra.mxu0 0.0
    %316 = vmatprep.subr.mxu0 0.0
    %317 = vmatpush1.msra.mxu0 0.0
    %318 = vmatprep.subr.mxu0 0.0
    %319 = vmatpush1.msra.mxu0 0.0
    %320 = vmatprep.subr.mxu0 0.0
    %321 = vmatpush1.msra.mxu0 0.0
    %322 = vmatprep.subr.mxu0 0.0
    %323 = vmatpush1.msra.mxu0 0.0
    %324 = vmatprep.subr.mxu0 0.0
    %325 = vmatpush1.msra.mxu0 0.0
    %326 = vmatprep.subr.mxu0 0.0
    %327 = vmatpush1.msra.mxu0 0.0
    %328 = vmatprep.subr.mxu0 0.0
    %329 = vmatpush1.msra.mxu0 0.0
    %330 = vmatprep.subr.mxu0 0.0
    %331 = vmatpush1.msra.mxu0 0.0
    %332 = vmatprep.subr.mxu0 0.0
    %333 = vmatpush1.msra.mxu0 0.0
    %334 = vmatprep.subr.mxu0 0.0
    %335 = vmatpush1.msra.mxu0 0.0
    %336 = vmatprep.subr.mxu0 0.0
    %337 = vmatpush1.msra.mxu0 0.0
    %338 = vmatprep.subr.mxu0 0.0
    %339 = vmatpush1.msra.mxu0 0.0
    %340 = vmatprep.subr.mxu0 0.0
    %341 = vmatpush1.msra.mxu0 0.0
    %342 = vmatprep.subr.mxu0 0.0
    %343 = vmatpush1.msra.mxu0 0.0
    %344 = vmatprep.subr.mxu0 0.0
    %345 = vmatpush1.msra.mxu0 0.0
    %346 = vmatprep.subr.mxu0 0.0
    %347 = vmatpush1.msra.mxu0 0.0
    %348 = vmatprep.subr.mxu0 0.0
    %349 = vmatpush1.msra.mxu0 0.0
    %350 = vmatprep.subr.mxu0 0.0
    %351 = vmatpush1.msra.mxu0 0.0
    %352 = vmatprep.mubr.f32.mxu0 0.0
    %353 = vmatmul.mubr.f32.gmra.mrb[0].mxu0 %v54
    %v354 = vpop.f32.mrb[0].mxu0
    %v355 = vadd.f32 0.0, %v354
    %v356 = vpop.f32.mrb[0].mxu0
    %v357 = vadd.f32 0.0, %v356
    %358 = vmatprep.mubr.f32.mxu0 0.0
    %359 = vmatmul.mubr.f32.gmra.mrb[0].mxu0 %v57
    %v360 = vpop.f32.mrb[0].mxu0
    %v361 = vadd.f32 0.0, %v360
    %v362 = vpop.f32.mrb[0].mxu0
    %v363 = vadd.f32 0.0, %v362
    %364 = vmatprep.mubr.f32.mxu0 0.0
    %365 = vmatmul.mubr.f32.gmra.mrb[0].mxu0 %v60
    %v366 = vpop.f32.mrb[0].mxu0
    %v367 = vadd.f32 0.0, %v366
    %v368 = vpop.f32.mrb[0].mxu0
    %v369 = vadd.f32 0.0, %v368
    %370 = vmatprep.mubr.f32.mxu0 0.0
    %371 = vmatmul.mubr.f32.gmra.mrb[0].mxu0 %v63
    %v372 = vpop.f32.mrb[0].mxu0
    %v373 = vadd.f32 0.0, %v372
    %v374 = vpop.f32.mrb[0].mxu0
    %v375 = vadd.f32 0.0, %v374
    %376 = vmatprep.mubr.f32.mxu0 0.0
    %377 = vmatmul.mubr.f32.gmra.mrb[0].mxu0 %v66
    %v378 = vpop.f32.mrb[0].mxu0
    %v379 = vadd.f32 0.0, %v378
    %v380 = vpop.f32.mrb[0].mxu0
    %v381 = vadd.f32 0.0, %v380
    %382 = vmatprep.mubr.f32.mxu0 0.0
    %383 = vmatmul.mubr.f32.gmra.mrb[0].mxu0 %v69
    %v384 = vpop.f32.mrb[0].mxu0
    %v385 = vadd.f32 0.0, %v384
    %v386 = vpop.f32.mrb[0].mxu0
    %v387 = vadd.f32 0.0, %v386
    %388 = vmatprep.mubr.f32.mxu0 0.0
    %389 = vmatmul.mubr.f32.gmra.mrb[0].mxu0 %v72
    %v390 = vpop.f32.mrb[0].mxu0
    %v391 = vadd.f32 0.0, %v390
    %v392 = vpop.f32.mrb[0].mxu0
    %v393 = vadd.f32 0.0, %v392
    %394 = vdwg.mxu0
    %395 = vmatprep.subr.mxu0 %v43
    %396 = vmatpush1.msra.mxu0 %v42
    %397 = vmatprep.subr.mxu0 %v51
    %398 = vmatpush1.msra.mxu0 %v50
    %399 = vmatprep.subr.mxu0 0.0
    %400 = vmatpush1.msra.mxu0 0.0
    %401 = vmatprep.subr.mxu0 0.0
    %402 = vmatpush1.msra.mxu0 0.0
    %403 = vmatprep.subr.mxu0 0.0
    %404 = vmatpush1.msra.mxu0 0.0
    %405 = vmatprep.subr.mxu0 0.0
    %406 = vmatpush1.msra.mxu0 0.0
    %407 = vmatprep.subr.mxu0 0.0
    %408 = vmatpush1.msra.mxu0 0.0
    %409 = vmatprep.subr.mxu0 0.0
    %410 = vmatpush1.msra.mxu0 0.0
    %411 = vmatprep.subr.mxu0 0.0
    %412 = vmatpush1.msra.mxu0 0.0
    %413 = vmatprep.subr.mxu0 0.0
    %414 = vmatpush1.msra.mxu0 0.0
    %415 = vmatprep.subr.mxu0 0.0
    %416 = vmatpush1.msra.mxu0 0.0
    %417 = vmatprep.subr.mxu0 0.0
    %418 = vmatpush1.msra.mxu0 0.0
    %419 = vmatprep.subr.mxu0 0.0
    %420 = vmatpush1.msra.mxu0 0.0
    %421 = vmatprep.subr.mxu0 0.0
    %422 = vmatpush1.msra.mxu0 0.0
    %423 = vmatprep.subr.mxu0 0.0
    %424 = vmatpush1.msra.mxu0 0.0
    %425 = vmatprep.subr.mxu0 0.0
    %426 = vmatpush1.msra.mxu0 0.0
    %427 = vmatprep.subr.mxu0 0.0
    %428 = vmatpush1.msra.mxu0 0.0
    %429 = vmatprep.subr.mxu0 0.0
    %430 = vmatpush1.msra.mxu0 0.0
    %431 = vmatprep.subr.mxu0 0.0
    %432 = vmatpush1.msra.mxu0 0.0
    %433 = vmatprep.subr.mxu0 0.0
    %434 = vmatpush1.msra.mxu0 0.0
    %435 = vmatprep.subr.mxu0 0.0
    %436 = vmatpush1.msra.mxu0 0.0
    %437 = vmatprep.subr.mxu0 0.0
    %438 = vmatpush1.msra.mxu0 0.0
    %439 = vmatprep.subr.mxu0 0.0
    %440 = vmatpush1.msra.mxu0 0.0
    %441 = vmatprep.subr.mxu0 0.0
    %442 = vmatpush1.msra.mxu0 0.0
    %443 = vmatprep.subr.mxu0 0.0
    %444 = vmatpush1.msra.mxu0 0.0
    %445 = vmatprep.subr.mxu0 0.0
    %446 = vmatpush1.msra.mxu0 0.0
    %447 = vmatprep.subr.mxu0 0.0
    %448 = vmatpush1.msra.mxu0 0.0
    %449 = vmatprep.subr.mxu0 0.0
    %450 = vmatpush1.msra.mxu0 0.0
    %451 = vmatprep.subr.mxu0 0.0
    %452 = vmatpush1.msra.mxu0 0.0
    %453 = vmatprep.subr.mxu0 0.0
    %454 = vmatpush1.msra.mxu0 0.0
    %455 = vmatprep.subr.mxu0 0.0
    %456 = vmatpush1.msra.mxu0 0.0
    %457 = vmatprep.subr.mxu0 0.0
    %458 = vmatpush1.msra.mxu0 0.0
    %459 = vmatprep.mubr.f32.mxu0 0.0
    %460 = vmatmul.mubr.f32.gmra.mrb[0].mxu0 %v54
    %v461 = vpop.f32.mrb[0].mxu0
    %v462 = vadd.f32 0.0, %v461
    %v463 = vpop.f32.mrb[0].mxu0
    %v464 = vadd.f32 0.0, %v463
    %465 = vmatprep.mubr.f32.mxu0 0.0
    %466 = vmatmul.mubr.f32.gmra.mrb[0].mxu0 %v57
    %v467 = vpop.f32.mrb[0].mxu0
    %v468 = vadd.f32 0.0, %v467
    %v469 = vpop.f32.mrb[0].mxu0
    %v470 = vadd.f32 0.0, %v469
    %471 = vmatprep.mubr.f32.mxu0 0.0
    %472 = vmatmul.mubr.f32.gmra.mrb[0].mxu0 %v60
    %v473 = vpop.f32.mrb[0].mxu0
    %v474 = vadd.f32 0.0, %v473
    %v475 = vpop.f32.mrb[0].mxu0
    %v476 = vadd.f32 0.0, %v475
    %477 = vmatprep.mubr.f32.mxu0 0.0
    %478 = vmatmul.mubr.f32.gmra.mrb[0].mxu0 %v63
    %v479 = vpop.f32.mrb[0].mxu0
    %v480 = vadd.f32 0.0, %v479
    %v481 = vpop.f32.mrb[0].mxu0
    %v482 = vadd.f32 0.0, %v481
    %483 = vmatprep.mubr.f32.mxu0 0.0
    %484 = vmatmul.mubr.f32.gmra.mrb[0].mxu0 %v66
    %v485 = vpop.f32.mrb[0].mxu0
    %v486 = vadd.f32 0.0, %v485
    %v487 = vpop.f32.mrb[0].mxu0
    %v488 = vadd.f32 0.0, %v487
    %489 = vmatprep.mubr.f32.mxu0 0.0
    %490 = vmatmul.mubr.f32.gmra.mrb[0].mxu0 %v69
    %v491 = vpop.f32.mrb[0].mxu0
    %v492 = vadd.f32 0.0, %v491
    %v493 = vpop.f32.mrb[0].mxu0
    %v494 = vadd.f32 0.0, %v493
    %495 = vmatprep.mubr.f32.mxu0 0.0
    %496 = vmatmul.mubr.f32.gmra.mrb[0].mxu0 %v72
    %v497 = vpop.f32.mrb[0].mxu0
    %v498 = vadd.f32 0.0, %v497
    %v499 = vpop.f32.mrb[0].mxu0
    %v500 = vadd.f32 0.0, %v499
    %501 = vdwg.mxu0
    %v502 = vmax.f32 %v141, 0.0
    %v503 = vmax.f32 %v143, 0.0
    %v504 = vmax.f32 %v248, 0.0
    %v505 = vmax.f32 %v250, 0.0
    %v506 = vmax.f32 %v355, 0.0
    %v507 = vmax.f32 %v357, 0.0
    %v508 = vmax.f32 %v462, 0.0
    %v509 = vmax.f32 %v464, 0.0
    %v510 = vmax.f32 %v147, 0.0
    %v511 = vmax.f32 %v149, 0.0
    %v512 = vmax.f32 %v254, 0.0
    %v513 = vmax.f32 %v256, 0.0
    %v514 = vmax.f32 %v361, 0.0
    %v515 = vmax.f32 %v363, 0.0
    %v516 = vmax.f32 %v468, 0.0
    %v517 = vmax.f32 %v470, 0.0
    %v518 = vmax.f32 %v153, 0.0
    %v519 = vmax.f32 %v155, 0.0
    %v520 = vmax.f32 %v260, 0.0
    %v521 = vmax.f32 %v262, 0.0
    %v522 = vmax.f32 %v367, 0.0
    %v523 = vmax.f32 %v369, 0.0
    %v524 = vmax.f32 %v474, 0.0
    %v525 = vmax.f32 %v476, 0.0
    %v526 = vmax.f32 %v159, 0.0
    %v527 = vmax.f32 %v161, 0.0
    %v528 = vmax.f32 %v266, 0.0
    %v529 = vmax.f32 %v268, 0.0
    %v530 = vmax.f32 %v373, 0.0
    %v531 = vmax.f32 %v375, 0.0
    %v532 = vmax.f32 %v480, 0.0
    %v533 = vmax.f32 %v482, 0.0
    %v534 = vmax.f32 %v165, 0.0
    %v535 = vmax.f32 %v167, 0.0
    %v536 = vmax.f32 %v272, 0.0
    %v537 = vmax.f32 %v274, 0.0
    %v538 = vmax.f32 %v379, 0.0
    %v539 = vmax.f32 %v381, 0.0
    %v540 = vmax.f32 %v486, 0.0
    %v541 = vmax.f32 %v488, 0.0
    %v542 = vmax.f32 %v171, 0.0
    %v543 = vmax.f32 %v173, 0.0
    %v544 = vmax.f32 %v278, 0.0
    %v545 = vmax.f32 %v280, 0.0
    %v546 = vmax.f32 %v385, 0.0
    %v547 = vmax.f32 %v387, 0.0
    %v548 = vmax.f32 %v492, 0.0
    %v549 = vmax.f32 %v494, 0.0
    %v550 = vmax.f32 %v177, 0.0
    %v551 = vmax.f32 %v179, 0.0
    %v552 = vmax.f32 %v284, 0.0
    %v553 = vmax.f32 %v286, 0.0
    %v554 = vmax.f32 %v391, 0.0
    %v555 = vmax.f32 %v393, 0.0
    %v556 = vmax.f32 %v498, 0.0
    %v557 = vmax.f32 %v500, 0.0
    %v558 = vld [vmem:[%s2] sm:$0xff]
    %vm559 = vcmask 457728
    %v561 = vsel %vm559, %v558, 0
    %563 = vmatprep.subr.mxu0 %v503
    %564 = vmatpush1.msra.mxu0 %v502
    %565 = vmatprep.subr.mxu0 %v511
    %566 = vmatpush1.msra.mxu0 %v510
    %567 = vmatprep.subr.mxu0 %v519
    %568 = vmatpush1.msra.mxu0 %v518
    %569 = vmatprep.subr.mxu0 %v527
    %570 = vmatpush1.msra.mxu0 %v526
    %571 = vmatprep.subr.mxu0 %v535
    %572 = vmatpush1.msra.mxu0 %v534
    %573 = vmatprep.subr.mxu0 %v543
    %574 = vmatpush1.msra.mxu0 %v542
    %575 = vmatprep.subr.mxu0 %v551
    %576 = vmatpush1.msra.mxu0 %v550
    %577 = vmatprep.subr.mxu0 0.0
    %578 = vmatpush1.msra.mxu0 0.0
    %579 = vmatprep.subr.mxu0 0.0
    %580 = vmatpush1.msra.mxu0 0.0
    %581 = vmatprep.subr.mxu0 0.0
    %582 = vmatpush1.msra.mxu0 0.0
    %583 = vmatprep.subr.mxu0 0.0
    %584 = vmatpush1.msra.mxu0 0.0
    %585 = vmatprep.subr.mxu0 0.0
    %586 = vmatpush1.msra.mxu0 0.0
    %587 = vmatprep.subr.mxu0 0.0
    %588 = vmatpush1.msra.mxu0 0.0
    %589 = vmatprep.subr.mxu0 0.0
    %590 = vmatpush1.msra.mxu0 0.0
    %591 = vmatprep.subr.mxu0 0.0
    %592 = vmatpush1.msra.mxu0 0.0
    %593 = vmatprep.subr.mxu0 0.0
    %594 = vmatpush1.msra.mxu0 0.0
    %595 = vmatprep.subr.mxu0 0.0
    %596 = vmatpush1.msra.mxu0 0.0
    %597 = vmatprep.subr.mxu0 0.0
    %598 = vmatpush1.msra.mxu0 0.0
    %599 = vmatprep.subr.mxu0 0.0
    %600 = vmatpush1.msra.mxu0 0.0
    %601 = vmatprep.subr.mxu0 0.0
    %602 = vmatpush1.msra.mxu0 0.0
    %603 = vmatprep.subr.mxu0 0.0
    %604 = vmatpush1.msra.mxu0 0.0
    %605 = vmatprep.subr.mxu0 0.0
    %606 = vmatpush1.msra.mxu0 0.0
    %607 = vmatprep.subr.mxu0 0.0
    %608 = vmatpush1.msra.mxu0 0.0
    %609 = vmatprep.subr.mxu0 0.0
    %610 = vmatpush1.msra.mxu0 0.0
    %611 = vmatprep.subr.mxu0 0.0
    %612 = vmatpush1.msra.mxu0 0.0
    %613 = vmatprep.subr.mxu0 0.0
    %614 = vmatpush1.msra.mxu0 0.0
    %615 = vmatprep.subr.mxu0 0.0
    %616 = vmatpush1.msra.mxu0 0.0
    %617 = vmatprep.subr.mxu0 0.0
    %618 = vmatpush1.msra.mxu0 0.0
    %619 = vmatprep.subr.mxu0 0.0
    %620 = vmatpush1.msra.mxu0 0.0
    %621 = vmatprep.subr.mxu0 0.0
    %622 = vmatpush1.msra.mxu0 0.0
    %623 = vmatprep.subr.mxu0 0.0
    %624 = vmatpush1.msra.mxu0 0.0
    %625 = vmatprep.subr.mxu0 0.0
    %626 = vmatpush1.msra.mxu0 0.0
    %627 = vmatprep.mubr.f32.mxu0 0.0
    %628 = vmatmul.mubr.f32.gmra.mrb[0].mxu0 %v561
    %v629 = vpop.f32.mrb[0].mxu0
    %v630 = vadd.f32 0.0, %v629
    %v631 = vpop.f32.mrb[0].mxu0
    %v632 = vadd.f32 0.0, %v631
    %633 = vdwg.mxu0
    %634 = vmatprep.subr.mxu0 %v505
    %635 = vmatpush1.msra.mxu0 %v504
    %636 = vmatprep.subr.mxu0 %v513
    %637 = vmatpush1.msra.mxu0 %v512
    %638 = vmatprep.subr.mxu0 %v521
    %639 = vmatpush1.msra.mxu0 %v520
    %640 = vmatprep.subr.mxu0 %v529
    %641 = vmatpush1.msra.mxu0 %v528
    %642 = vmatprep.subr.mxu0 %v537
    %643 = vmatpush1.msra.mxu0 %v536
    %644 = vmatprep.subr.mxu0 %v545
    %645 = vmatpush1.msra.mxu0 %v544
    %646 = vmatprep.subr.mxu0 %v553
    %647 = vmatpush1.msra.mxu0 %v552
    %648 = vmatprep.subr.mxu0 0.0
    %649 = vmatpush1.msra.mxu0 0.0
    %650 = vmatprep.subr.mxu0 0.0
    %651 = vmatpush1.msra.mxu0 0.0
    %652 = vmatprep.subr.mxu0 0.0
    %653 = vmatpush1.msra.mxu0 0.0
    %654 = vmatprep.subr.mxu0 0.0
    %655 = vmatpush1.msra.mxu0 0.0
    %656 = vmatprep.subr.mxu0 0.0
    %657 = vmatpush1.msra.mxu0 0.0
    %658 = vmatprep.subr.mxu0 0.0
    %659 = vmatpush1.msra.mxu0 0.0
    %660 = vmatprep.subr.mxu0 0.0
    %661 = vmatpush1.msra.mxu0 0.0
    %662 = vmatprep.subr.mxu0 0.0
    %663 = vmatpush1.msra.mxu0 0.0
    %664 = vmatprep.subr.mxu0 0.0
    %665 = vmatpush1.msra.mxu0 0.0
    %666 = vmatprep.subr.mxu0 0.0
    %667 = vmatpush1.msra.mxu0 0.0
    %668 = vmatprep.subr.mxu0 0.0
    %669 = vmatpush1.msra.mxu0 0.0
    %670 = vmatprep.subr.mxu0 0.0
    %671 = vmatpush1.msra.mxu0 0.0
    %672 = vmatprep.subr.mxu0 0.0
    %673 = vmatpush1.msra.mxu0 0.0
    %674 = vmatprep.subr.mxu0 0.0
    %675 = vmatpush1.msra.mxu0 0.0
    %676 = vmatprep.subr.mxu0 0.0
    %677 = vmatpush1.msra.mxu0 0.0
    %678 = vmatprep.subr.mxu0 0.0
    %679 = vmatpush1.msra.mxu0 0.0
    %680 = vmatprep.subr.mxu0 0.0
    %681 = vmatpush1.msra.mxu0 0.0
    %682 = vmatprep.subr.mxu0 0.0
    %683 = vmatpush1.msra.mxu0 0.0
    %684 = vmatprep.subr.mxu0 0.0
    %685 = vmatpush1.msra.mxu0 0.0
    %686 = vmatprep.subr.mxu0 0.0
    %687 = vmatpush1.msra.mxu0 0.0
    %688 = vmatprep.subr.mxu0 0.0
    %689 = vmatpush1.msra.mxu0 0.0
    %690 = vmatprep.subr.mxu0 0.0
    %691 = vmatpush1.msra.mxu0 0.0
    %692 = vmatprep.subr.mxu0 0.0
    %693 = vmatpush1.msra.mxu0 0.0
    %694 = vmatprep.subr.mxu0 0.0
    %695 = vmatpush1.msra.mxu0 0.0
    %696 = vmatprep.subr.mxu0 0.0
    %697 = vmatpush1.msra.mxu0 0.0
    %698 = vmatprep.mubr.f32.mxu0 0.0
    %699 = vmatmul.mubr.f32.gmra.mrb[0].mxu0 %v561
    %v700 = vpop.f32.mrb[0].mxu0
    %v701 = vadd.f32 0.0, %v700
    %v702 = vpop.f32.mrb[0].mxu0
    %v703 = vadd.f32 0.0, %v702
    %704 = vdwg.mxu0
    %705 = vmatprep.subr.mxu0 %v507
    %706 = vmatpush1.msra.mxu0 %v506
    %707 = vmatprep.subr.mxu0 %v515
    %708 = vmatpush1.msra.mxu0 %v514
    %709 = vmatprep.subr.mxu0 %v523
    %710 = vmatpush1.msra.mxu0 %v522
    %711 = vmatprep.subr.mxu0 %v531
    %712 = vmatpush1.msra.mxu0 %v530
    %713 = vmatprep.subr.mxu0 %v539
    %714 = vmatpush1.msra.mxu0 %v538
    %715 = vmatprep.subr.mxu0 %v547
    %716 = vmatpush1.msra.mxu0 %v546
    %717 = vmatprep.subr.mxu0 %v555
    %718 = vmatpush1.msra.mxu0 %v554
    %719 = vmatprep.subr.mxu0 0.0
    %720 = vmatpush1.msra.mxu0 0.0
    %721 = vmatprep.subr.mxu0 0.0
    %722 = vmatpush1.msra.mxu0 0.0
    %723 = vmatprep.subr.mxu0 0.0
    %724 = vmatpush1.msra.mxu0 0.0
    %725 = vmatprep.subr.mxu0 0.0
    %726 = vmatpush1.msra.mxu0 0.0
    %727 = vmatprep.subr.mxu0 0.0
    %728 = vmatpush1.msra.mxu0 0.0
    %729 = vmatprep.subr.mxu0 0.0
    %730 = vmatpush1.msra.mxu0 0.0
    %731 = vmatprep.subr.mxu0 0.0
    %732 = vmatpush1.msra.mxu0 0.0
    %733 = vmatprep.subr.mxu0 0.0
    %734 = vmatpush1.msra.mxu0 0.0
    %735 = vmatprep.subr.mxu0 0.0
    %736 = vmatpush1.msra.mxu0 0.0
    %737 = vmatprep.subr.mxu0 0.0
    %738 = vmatpush1.msra.mxu0 0.0
    %739 = vmatprep.subr.mxu0 0.0
    %740 = vmatpush1.msra.mxu0 0.0
    %741 = vmatprep.subr.mxu0 0.0
    %742 = vmatpush1.msra.mxu0 0.0
    %743 = vmatprep.subr.mxu0 0.0
    %744 = vmatpush1.msra.mxu0 0.0
    %745 = vmatprep.subr.mxu0 0.0
    %746 = vmatpush1.msra.mxu0 0.0
    %747 = vmatprep.subr.mxu0 0.0
    %748 = vmatpush1.msra.mxu0 0.0
    %749 = vmatprep.subr.mxu0 0.0
    %750 = vmatpush1.msra.mxu0 0.0
    %751 = vmatprep.subr.mxu0 0.0
    %752 = vmatpush1.msra.mxu0 0.0
    %753 = vmatprep.subr.mxu0 0.0
    %754 = vmatpush1.msra.mxu0 0.0
    %755 = vmatprep.subr.mxu0 0.0
    %756 = vmatpush1.msra.mxu0 0.0
    %757 = vmatprep.subr.mxu0 0.0
    %758 = vmatpush1.msra.mxu0 0.0
    %759 = vmatprep.subr.mxu0 0.0
    %760 = vmatpush1.msra.mxu0 0.0
    %761 = vmatprep.subr.mxu0 0.0
    %762 = vmatpush1.msra.mxu0 0.0
    %763 = vmatprep.subr.mxu0 0.0
    %764 = vmatpush1.msra.mxu0 0.0
    %765 = vmatprep.subr.mxu0 0.0
    %766 = vmatpush1.msra.mxu0 0.0
    %767 = vmatprep.subr.mxu0 0.0
    %768 = vmatpush1.msra.mxu0 0.0
    %769 = vmatprep.mubr.f32.mxu0 0.0
    %770 = vmatmul.mubr.f32.gmra.mrb[0].mxu0 %v561
    %v771 = vpop.f32.mrb[0].mxu0
    %v772 = vadd.f32 0.0, %v771
    %v773 = vpop.f32.mrb[0].mxu0
    %v774 = vadd.f32 0.0, %v773
    %775 = vdwg.mxu0
    %776 = vmatprep.subr.mxu0 %v509
    %777 = vmatpush1.msra.mxu0 %v508
    %778 = vmatprep.subr.mxu0 %v517
    %779 = vmatpush1.msra.mxu0 %v516
    %780 = vmatprep.subr.mxu0 %v525
    %781 = vmatpush1.msra.mxu0 %v524
    %782 = vmatprep.subr.mxu0 %v533
    %783 = vmatpush1.msra.mxu0 %v532
    %784 = vmatprep.subr.mxu0 %v541
    %785 = vmatpush1.msra.mxu0 %v540
    %786 = vmatprep.subr.mxu0 %v549
    %787 = vmatpush1.msra.mxu0 %v548
    %788 = vmatprep.subr.mxu0 %v557
    %789 = vmatpush1.msra.mxu0 %v556
    %790 = vmatprep.subr.mxu0 0.0
    %791 = vmatpush1.msra.mxu0 0.0
    %792 = vmatprep.subr.mxu0 0.0
    %793 = vmatpush1.msra.mxu0 0.0
    %794 = vmatprep.subr.mxu0 0.0
    %795 = vmatpush1.msra.mxu0 0.0
    %796 = vmatprep.subr.mxu0 0.0
    %797 = vmatpush1.msra.mxu0 0.0
    %798 = vmatprep.subr.mxu0 0.0
    %799 = vmatpush1.msra.mxu0 0.0
    %800 = vmatprep.subr.mxu0 0.0
    %801 = vmatpush1.msra.mxu0 0.0
    %802 = vmatprep.subr.mxu0 0.0
    %803 = vmatpush1.msra.mxu0 0.0
    %804 = vmatprep.subr.mxu0 0.0
    %805 = vmatpush1.msra.mxu0 0.0
    %806 = vmatprep.subr.mxu0 0.0
    %807 = vmatpush1.msra.mxu0 0.0
    %808 = vmatprep.subr.mxu0 0.0
    %809 = vmatpush1.msra.mxu0 0.0
    %810 = vmatprep.subr.mxu0 0.0
    %811 = vmatpush1.msra.mxu0 0.0
    %812 = vmatprep.subr.mxu0 0.0
    %813 = vmatpush1.msra.mxu0 0.0
    %814 = vmatprep.subr.mxu0 0.0
    %815 = vmatpush1.msra.mxu0 0.0
    %816 = vmatprep.subr.mxu0 0.0
    %817 = vmatpush1.msra.mxu0 0.0
    %818 = vmatprep.subr.mxu0 0.0
    %819 = vmatpush1.msra.mxu0 0.0
    %820 = vmatprep.subr.mxu0 0.0
    %821 = vmatpush1.msra.mxu0 0.0
    %822 = vmatprep.subr.mxu0 0.0
    %823 = vmatpush1.msra.mxu0 0.0
    %824 = vmatprep.subr.mxu0 0.0
    %825 = vmatpush1.msra.mxu0 0.0
    %826 = vmatprep.subr.mxu0 0.0
    %827 = vmatpush1.msra.mxu0 0.0
    %828 = vmatprep.subr.mxu0 0.0
    %829 = vmatpush1.msra.mxu0 0.0
    %830 = vmatprep.subr.mxu0 0.0
    %831 = vmatpush1.msra.mxu0 0.0
    %832 = vmatprep.subr.mxu0 0.0
    %833 = vmatpush1.msra.mxu0 0.0
    %834 = vmatprep.subr.mxu0 0.0
    %835 = vmatpush1.msra.mxu0 0.0
    %836 = vmatprep.subr.mxu0 0.0
    %837 = vmatpush1.msra.mxu0 0.0
    %838 = vmatprep.subr.mxu0 0.0
    %839 = vmatpush1.msra.mxu0 0.0
    %840 = vmatprep.mubr.f32.mxu0 0.0
    %841 = vmatmul.mubr.f32.gmra.mrb[0].mxu0 %v561
    %v842 = vpop.f32.mrb[0].mxu0
    %v843 = vadd.f32 0.0, %v842
    %v844 = vpop.f32.mrb[0].mxu0
    %v845 = vadd.f32 0.0, %v844
    %846 = vdwg.mxu0
    %v855 = vcombine.low %v630, %v632
    %v856 = vcombine.low %v701, %v703
    %v857 = vcombine.low %v772, %v774
    %v858 = vcombine.low %v843, %v845
    %v860 = vunpack.c.l.s4 1966171168
    %v861 = vunpack.c.0.s8 %v860
    %v862 = vlaneseq
    %v863 = vshrl.u32 %v862, 7
    %v864 = vsub.s32 %v861, %v863
    %v865 = vrot.slane %v855, %v864
    %v867 = vunpack.c.l.s4 1966171168
    %v868 = vunpack.c.0.s8 %v867
    %v869 = vlaneseq
    %v870 = vshrl.u32 %v869, 7
    %v871 = vsub.s32 %v868, %v870
    %v872 = vrot.slane %v856, %v871
    %v874 = vunpack.c.l.s4 1966171168
    %v875 = vunpack.c.0.s8 %v874
    %v876 = vlaneseq
    %v877 = vshrl.u32 %v876, 7
    %v878 = vsub.s32 %v875, %v877
    %v879 = vrot.slane %v857, %v878
    %v881 = vunpack.c.l.s4 1966171168
    %v882 = vunpack.c.0.s8 %v881
    %v883 = vlaneseq
    %v884 = vshrl.u32 %v883, 7
    %v885 = vsub.s32 %v882, %v884
    %v886 = vrot.slane %v858, %v885
    %v887 = vcombine.low %v865, %v872
    %v888 = vcombine.low %v879, %v886
    %v890 = vunpack.c.l.s4 1966171168
    %v891 = vunpack.c.0.s8 %v890
    %v892 = vlaneseq
    %v893 = vshrl.u32 %v892, 7
    %v894 = vsub.s32 %v891, %v893
    %v895 = vrot.slane %v887, %v894
    %v897 = vunpack.c.l.s4 1966171168
    %v898 = vunpack.c.0.s8 %v897
    %v899 = vlaneseq
    %v900 = vshrl.u32 %v899, 7
    %v901 = vsub.s32 %v898, %v900
    %v902 = vrot.slane %v888, %v901
    %v903 = vcombine.low %v895, %v902
    %v905 = vlaneseq
    %vm906 = vcmp.ge.s32.totalorder %v905, 0
    %vm907 = vcmp.lt.s32.totalorder %v905, 1000
    %vm908 = vmand %vm906, %vm907
    %909 = vst.msk [vmem:[#allocation5] sm:$0xff] %vm908, %v903
    // Predicated region
    $region18: #{tpu_custom_call.1} parent=1 // pred_check
      _
    $region19: #{tpu_custom_call.1} parent=1 // pred_check_branch
      %911 = sbr.rel (0) target = $region21
    $region20: #{tpu_custom_call.1} parent=1 // pred_region
      %s913 = ssub.s32 128, 128
      %914 = vsyncadd [#allocation4], %s913
      %s916 = sshll.u32 [#allocation5], 4
      %s917 = int_to_ptr.vmem [resolvable:$true] %s916
      %919 = dma.vmem_to_hbm [thread:$0]  %s917, 128, %s3, [#allocation4]
    $region21: #{tpu_custom_call.1} parent=1 // pred_fallthru
      _
    // Predicated region
    $region22: #{tpu_custom_call.1} parent=1 // pred_check
      _
    $region23: #{tpu_custom_call.1} parent=1 // pred_check_branch
      %921 = sbr.rel (0) target = $region25
    $region24: #{tpu_custom_call.1} parent=1 // pred_region
      %922 = dma.done [#allocation4], 128
    $region25: #{tpu_custom_call.1} parent=1 // pred_fallthru
      _
    %923 = vsyncpa [#allocation3], 1
    %924 = vsyncpa [#allocation4], 1

</llo_original>
